<compile_context>
chip_gen: v6e
topology: v6e:2x2x1
jax: 0.10.0
libtpu: 0.0.40
codegen_flags: <defaults>
</compile_context>

<pallas_src>
import jax
import jax.numpy as jnp
from jax.experimental import pallas as pl

# ---------------- model dims (small, consistent with the module) ----------------
DIM_DRUG = 16      # atom feature dim
HIDDEN = 32        # Encoder GCN hidden
EMB = 64           # Encoder output dim
DIM_CELL = 32      # gene-expression dim
CELL_HID = 256     # fc_cell1 width
BN_EPS = 1e-5


# =============================== Pallas kernel ===============================

def _encoder_kernel(feat_ref, adj_ref, mask_ref, gexpr_ref,
                    w1_ref, b1_ref, w2_ref, b2_ref,
                    wc1_ref, bc1_ref, wc2_ref, bc2_ref,
                    drug_ref, cell_ref):
    """Fused Encoder forward. All operands are whole-array VMEM blocks.

    drug branch : relu(A @ (X  @ W1) + b1)   (BN1 folded into W1/b1)
                  relu(A @ (h  @ W2) + b2)   (BN2 folded into W2/b2)
                  global max pool over atoms via one-hot mask (G, N)
    cell branch : relu(G @ Wc1 + bc1)        (BN folded into Wc1/bc1)
                  relu(.. @ Wc2 + bc2)
    """
    adj = adj_ref[...]

    # ---- drug branch: GCN layer 1 ----
    h = jnp.dot(feat_ref[...], w1_ref[...], preferred_element_type=jnp.float32)
    h = jnp.dot(adj, h, preferred_element_type=jnp.float32) + b1_ref[...]
    h = jnp.maximum(h, 0.0)

    # ---- drug branch: GCN layer 2 ----
    h = jnp.dot(h, w2_ref[...], preferred_element_type=jnp.float32)
    h = jnp.dot(adj, h, preferred_element_type=jnp.float32) + b2_ref[...]
    h = jnp.maximum(h, 0.0)

    # ---- global max pool (vectorized masked segment max) ----
    mask = mask_ref[...]                                   # (G, N) one-hot
    masked = jnp.where(mask[:, :, None] > 0.5, h[None, :, :], jnp.float32(-1e30))
    drug_ref[...] = jnp.max(masked, axis=1)                # (G, EMB)

    # ---- cell-line branch ----
    c = jnp.dot(gexpr_ref[...], wc1_ref[...], preferred_element_type=jnp.float32) + bc1_ref[...]
    c = jnp.maximum(c, 0.0)
    c = jnp.dot(c, wc2_ref[...], preferred_element_type=jnp.float32) + bc2_ref[...]
    cell_ref[...] = jnp.maximum(c, 0.0)                    # (n_cells, EMB)


# =============================== wrapper ===============================

def encoder_forward(params, drug_feature, drug_adj_norm, pool_mask, gexpr):
    """Fused Encoder forward. pool_mask is the (n_drugs, n_atoms) one-hot of ibatch."""
    f32 = jnp.float32
    s = f32((1.0 + BN_EPS) ** -0.5)   # eval-mode BN affine (gamma=1, beta=0, mean=0, var=1)

    # Fold BatchNorm scale into weights/biases at trace time (ReLU commutes with s > 0).
    w1 = (params["conv1_w"] * s).astype(f32)
    b1 = (params["conv1_b"] * s).reshape(1, -1).astype(f32)
    w2 = (params["conv2_w"] * s).astype(f32)
    b2 = (params["conv2_b"] * s).reshape(1, -1).astype(f32)
    wc1 = (params["fc_cell1_w"] * s).astype(f32)
    bc1 = (params["fc_cell1_b"] * s).reshape(1, -1).astype(f32)
    wc2 = params["fc_cell2_w"].astype(f32)
    bc2 = params["fc_cell2_b"].reshape(1, -1).astype(f32)

    n_drugs = pool_mask.shape[0]
    n_cells = gexpr.shape[0]

    return pl.pallas_call(
        _encoder_kernel,
        out_shape=(jax.ShapeDtypeStruct((n_drugs, EMB), f32),
                   jax.ShapeDtypeStruct((n_cells, EMB), f32)),
    )(drug_feature.astype(f32), drug_adj_norm.astype(f32),
      pool_mask.astype(f32), gexpr.astype(f32),
      w1, b1, w2, b2, wc1, bc1, wc2, bc2)


def encoder_reference(params, drug_feature, drug_adj_norm, pool_mask, gexpr):
    """Pure-JAX reference (eval-mode BN), for correctness checking."""
    hp = jax.lax.Precision.HIGHEST
    s = (1.0 + BN_EPS) ** -0.5
    x = jnp.dot(drug_adj_norm, jnp.dot(drug_feature, params["conv1_w"], precision=hp),
                precision=hp) + params["conv1_b"]
    x = jnp.maximum(x, 0.0) * s
    x = jnp.dot(drug_adj_norm, jnp.dot(x, params["conv2_w"], precision=hp),
                precision=hp) + params["conv2_b"]
    x = jnp.maximum(x, 0.0) * s
    drug = jnp.max(jnp.where(pool_mask[:, :, None] > 0.5, x[None, :, :], -jnp.inf), axis=1)
    c = jnp.maximum(jnp.dot(gexpr, params["fc_cell1_w"], precision=hp)
                    + params["fc_cell1_b"], 0.0) * s
    c = jnp.maximum(jnp.dot(c, params["fc_cell2_w"], precision=hp)
                    + params["fc_cell2_b"], 0.0)
    return drug, c


# =============================== params ===============================

def xavier(key, shape):
    fan_in, fan_out = shape
    limit = (6.0 / (fan_in + fan_out)) ** 0.5
    return jax.random.uniform(key, shape, jnp.float32, -limit, limit)


def init_params(key):
    k1, k2, k3, k4 = jax.random.split(key, 4)
    return dict(
        conv1_w=xavier(k1, (DIM_DRUG, HIDDEN)), conv1_b=jnp.zeros((HIDDEN,), jnp.float32),
        conv2_w=xavier(k2, (HIDDEN, EMB)), conv2_b=jnp.zeros((EMB,), jnp.float32),
        fc_cell1_w=xavier(k3, (DIM_CELL, CELL_HID)), fc_cell1_b=jnp.zeros((CELL_HID,), jnp.float32),
        fc_cell2_w=xavier(k4, (CELL_HID, EMB)), fc_cell2_b=jnp.zeros((EMB,), jnp.float32),
    )


# =============================== main ===============================

if __name__ == "__main__":
    key = jax.random.PRNGKey(0)
    kp, kd, kg = jax.random.split(key, 3)
    params = init_params(kp)

    n_atoms_per_drug = 6
    n_drugs = 4
    n_atoms = n_atoms_per_drug * n_drugs       # 24 atom nodes
    n_cells = 3

    drug_feature = jax.random.normal(kd, (n_atoms, DIM_DRUG), jnp.float32)
    gexpr_data = jax.random.normal(kg, (n_cells, DIM_CELL), jnp.float32)

    # atom -> drug assignment (ibatch) and chain adjacency within each drug
    ibatch = jnp.repeat(jnp.arange(n_drugs), n_atoms_per_drug)
    rows, cols = [], []
    for d in range(n_drugs):
        for i in range(n_atoms_per_drug - 1):
            a = d * n_atoms_per_drug + i
            rows += [a, a + 1]
            cols += [a + 1, a]
    drug_adj = jnp.zeros((n_atoms, n_atoms), jnp.float32)
    drug_adj = drug_adj.at[jnp.array(rows), jnp.array(cols)].set(1.0)

    # GCN symmetric normalization: D^-1/2 (A + I) D^-1/2
    a_hat = drug_adj + jnp.eye(n_atoms, dtype=jnp.float32)
    dinv = 1.0 / jnp.sqrt(jnp.sum(a_hat, axis=1))
    drug_adj_norm = a_hat * dinv[:, None] * dinv[None, :]

    # one-hot (n_drugs, n_atoms) mask equivalent to global_max_pool's ibatch
    pool_mask = (jnp.arange(n_drugs)[:, None] == ibatch[None, :]).astype(jnp.float32)

    fwd = jax.jit(encoder_forward)
    drug_embed, cell_embed = fwd(params, drug_feature, drug_adj_norm, pool_mask, gexpr_data)
    drug_embed, cell_embed = jax.block_until_ready((drug_embed, cell_embed))

    ref_drug, ref_cell = encoder_reference(params, drug_feature, drug_adj_norm,
                                           pool_mask, gexpr_data)

    assert drug_embed.shape == (n_drugs, EMB)
    assert cell_embed.shape == (n_cells, EMB)
    assert bool(jnp.all(jnp.isfinite(drug_embed)))
    assert bool(jnp.all(jnp.isfinite(cell_embed)))
    assert bool(jnp.allclose(drug_embed, ref_drug, rtol=1e-2, atol=1e-2))
    assert bool(jnp.allclose(cell_embed, ref_cell, rtol=1e-2, atol=1e-2))
    print("KERNEL_OK")
</pallas_src>

<mosaic_0001>
module attributes {stable_mosaic.version = 11 : i64} {
  func.func @_encoder_kernel(%arg0: memref<24x16xf32, #tpu.memory_space<vmem>>, %arg1: memref<24x24xf32, #tpu.memory_space<vmem>>, %arg2: memref<4x24xf32, #tpu.memory_space<vmem>>, %arg3: memref<3x32xf32, #tpu.memory_space<vmem>>, %arg4: memref<16x32xf32, #tpu.memory_space<vmem>>, %arg5: memref<1x32xf32, #tpu.memory_space<vmem>>, %arg6: memref<32x64xf32, #tpu.memory_space<vmem>>, %arg7: memref<1x64xf32, #tpu.memory_space<vmem>>, %arg8: memref<32x256xf32, #tpu.memory_space<vmem>>, %arg9: memref<1x256xf32, #tpu.memory_space<vmem>>, %arg10: memref<256x64xf32, #tpu.memory_space<vmem>>, %arg11: memref<1x64xf32, #tpu.memory_space<vmem>>, %arg12: memref<4x64xf32, #tpu.memory_space<vmem>>, %arg13: memref<3x64xf32, #tpu.memory_space<vmem>>) attributes {dimension_semantics = [], scalar_prefetch = 0 : i64, scratch_operands = 0 : i64, tpu.core_type = #tpu.core_type<tc>} {
    %c0 = arith.constant 0 : index
    %c0_0 = arith.constant 0 : index
    %0 = vector.load %arg1[%c0, %c0_0] : memref<24x24xf32, #tpu.memory_space<vmem>>, vector<24x24xf32>
    %c0_1 = arith.constant 0 : index
    %c0_2 = arith.constant 0 : index
    %1 = vector.load %arg0[%c0_1, %c0_2] : memref<24x16xf32, #tpu.memory_space<vmem>>, vector<24x16xf32>
    %c0_3 = arith.constant 0 : index
    %c0_4 = arith.constant 0 : index
    %2 = vector.load %arg4[%c0_3, %c0_4] : memref<16x32xf32, #tpu.memory_space<vmem>>, vector<16x32xf32>
    %cst = arith.constant dense<0.000000e+00> : vector<24x32xf32>
    %3 = tpu.matmul %1, %2, %cst {dimension_numbers = #tpu.dot_dimension_numbers<[1], [0], [0], [1], [0, 0, 1, 1], [], []>} : vector<24x16xf32>, vector<16x32xf32>, vector<24x32xf32> -> vector<24x32xf32>
    %cst_5 = arith.constant dense<0.000000e+00> : vector<24x32xf32>
    %4 = tpu.matmul %0, %3, %cst_5 {dimension_numbers = #tpu.dot_dimension_numbers<[1], [0], [0], [1], [0, 0, 1, 1], [], []>} : vector<24x24xf32>, vector<24x32xf32>, vector<24x32xf32> -> vector<24x32xf32>
    %c0_6 = arith.constant 0 : index
    %c0_7 = arith.constant 0 : index
    %5 = vector.load %arg5[%c0_6, %c0_7] : memref<1x32xf32, #tpu.memory_space<vmem>>, vector<1x32xf32>
    %6 = vector.broadcast %5 : vector<1x32xf32> to vector<24x32xf32>
    %7 = arith.addf %4, %6 : vector<24x32xf32>
    %cst_8 = arith.constant 0.000000e+00 : f32
    %8 = vector.broadcast %cst_8 : f32 to vector<24x32xf32>
    %9 = arith.maximumf %7, %8 : vector<24x32xf32>
    %c0_9 = arith.constant 0 : index
    %c0_10 = arith.constant 0 : index
    %10 = vector.load %arg6[%c0_9, %c0_10] : memref<32x64xf32, #tpu.memory_space<vmem>>, vector<32x64xf32>
    %cst_11 = arith.constant dense<0.000000e+00> : vector<24x64xf32>
    %11 = tpu.matmul %9, %10, %cst_11 {dimension_numbers = #tpu.dot_dimension_numbers<[1], [0], [0], [1], [0, 0, 1, 1], [], []>} : vector<24x32xf32>, vector<32x64xf32>, vector<24x64xf32> -> vector<24x64xf32>
    %cst_12 = arith.constant dense<0.000000e+00> : vector<24x64xf32>
    %12 = tpu.matmul %0, %11, %cst_12 {dimension_numbers = #tpu.dot_dimension_numbers<[1], [0], [0], [1], [0, 0, 1, 1], [], []>} : vector<24x24xf32>, vector<24x64xf32>, vector<24x64xf32> -> vector<24x64xf32>
    %c0_13 = arith.constant 0 : index
    %c0_14 = arith.constant 0 : index
    %13 = vector.load %arg7[%c0_13, %c0_14] : memref<1x64xf32, #tpu.memory_space<vmem>>, vector<1x64xf32>
    %14 = vector.broadcast %13 : vector<1x64xf32> to vector<24x64xf32>
    %15 = arith.addf %12, %14 : vector<24x64xf32>
    %cst_15 = arith.constant 0.000000e+00 : f32
    %16 = vector.broadcast %cst_15 : f32 to vector<24x64xf32>
    %17 = arith.maximumf %15, %16 : vector<24x64xf32>
    %c0_16 = arith.constant 0 : index
    %c0_17 = arith.constant 0 : index
    %18 = vector.load %arg2[%c0_16, %c0_17] : memref<4x24xf32, #tpu.memory_space<vmem>>, vector<4x24xf32>
    %19 = vector.shape_cast %18 : vector<4x24xf32> to vector<4x24x1xf32>
    %cst_18 = arith.constant 5.000000e-01 : f32
    %20 = vector.broadcast %cst_18 : f32 to vector<4x24x1xf32>
    %21 = arith.cmpf ogt, %19, %20 : vector<4x24x1xf32>
    %22 = vector.shape_cast %17 : vector<24x64xf32> to vector<1x24x64xf32>
    %cst_19 = arith.constant -1.000000e+30 : f32
    %23 = vector.shape_cast %21 : vector<4x24x1xi1> to vector<4x24x1xi1>
    %24 = vector.broadcast %23 : vector<4x24x1xi1> to vector<4x24x64xi1>
    %25 = vector.shape_cast %22 : vector<1x24x64xf32> to vector<1x24x64xf32>
    %26 = vector.broadcast %25 : vector<1x24x64xf32> to vector<4x24x64xf32>
    %27 = vector.broadcast %cst_19 : f32 to vector<4x24x64xf32>
    %28 = arith.select %24, %26, %27 : vector<4x24x64xi1>, vector<4x24x64xf32>
    %cst_20 = arith.constant dense<0xFF800000> : vector<4x64xf32>
    %29 = vector.multi_reduction <maximumf>, %28, %cst_20 [1] : vector<4x24x64xf32> to vector<4x64xf32>
    %c0_21 = arith.constant 0 : index
    %c0_22 = arith.constant 0 : index
    %30 = vector.load %arg12[%c0_21, %c0_22] : memref<4x64xf32, #tpu.memory_space<vmem>>, vector<4x64xf32>
    tpu.vector_store %arg12[%c0_21, %c0_22], %29 {strides = array<i32>} : memref<4x64xf32, #tpu.memory_space<vmem>>, vector<4x64xf32>,
    %c0_23 = arith.constant 0 : index
    %c0_24 = arith.constant 0 : index
    %31 = vector.load %arg3[%c0_23, %c0_24] : memref<3x32xf32, #tpu.memory_space<vmem>>, vector<3x32xf32>
    %c0_25 = arith.constant 0 : index
    %c0_26 = arith.constant 0 : index
    %32 = vector.load %arg8[%c0_25, %c0_26] : memref<32x256xf32, #tpu.memory_space<vmem>>, vector<32x256xf32>
    %cst_27 = arith.constant dense<0.000000e+00> : vector<3x256xf32>
    %33 = tpu.matmul %31, %32, %cst_27 {dimension_numbers = #tpu.dot_dimension_numbers<[1], [0], [0], [1], [0, 0, 1, 1], [], []>} : vector<3x32xf32>, vector<32x256xf32>, vector<3x256xf32> -> vector<3x256xf32>
    %c0_28 = arith.constant 0 : index
    %c0_29 = arith.constant 0 : index
    %34 = vector.load %arg9[%c0_28, %c0_29] : memref<1x256xf32, #tpu.memory_space<vmem>>, vector<1x256xf32>
    %35 = vector.broadcast %34 : vector<1x256xf32> to vector<3x256xf32>
    %36 = arith.addf %33, %35 : vector<3x256xf32>
    %cst_30 = arith.constant 0.000000e+00 : f32
    %37 = vector.broadcast %cst_30 : f32 to vector<3x256xf32>
    %38 = arith.maximumf %36, %37 : vector<3x256xf32>
    %c0_31 = arith.constant 0 : index
    %c0_32 = arith.constant 0 : index
    %39 = vector.load %arg10[%c0_31, %c0_32] : memref<256x64xf32, #tpu.memory_space<vmem>>, vector<256x64xf32>
    %cst_33 = arith.constant dense<0.000000e+00> : vector<3x64xf32>
    %40 = tpu.matmul %38, %39, %cst_33 {dimension_numbers = #tpu.dot_dimension_numbers<[1], [0], [0], [1], [0, 0, 1, 1], [], []>} : vector<3x256xf32>, vector<256x64xf32>, vector<3x64xf32> -> vector<3x64xf32>
    %c0_34 = arith.constant 0 : index
    %c0_35 = arith.constant 0 : index
    %41 = vector.load %arg11[%c0_34, %c0_35] : memref<1x64xf32, #tpu.memory_space<vmem>>, vector<1x64xf32>
    %42 = vector.broadcast %41 : vector<1x64xf32> to vector<3x64xf32>
    %43 = arith.addf %40, %42 : vector<3x64xf32>
    %cst_36 = arith.constant 0.000000e+00 : f32
    %44 = vector.broadcast %cst_36 : f32 to vector<3x64xf32>
    %45 = arith.maximumf %43, %44 : vector<3x64xf32>
    %c0_37 = arith.constant 0 : index
    %c0_38 = arith.constant 0 : index
    %46 = vector.load %arg13[%c0_37, %c0_38] : memref<3x64xf32, #tpu.memory_space<vmem>>, vector<3x64xf32>
    tpu.vector_store %arg13[%c0_37, %c0_38], %45 {strides = array<i32>} : memref<3x64xf32, #tpu.memory_space<vmem>>, vector<3x64xf32>,
    return
  }
}

</mosaic_0001>

<llo_original>
// kernel: encoder_forward.1
$region0: #{encoder_forward.1}
  #allocation0 [shape = 'u32[]', space=smem, size = 0x4, offset = 0x4, fixed_abs, tag = 'smem constant byte address 0x4 - core index']
  #allocation1 [shape = 'u32[144,128]{1,0:T(1,128)}', space=vmem, size = 0x12000, scoped, tag = 'internal scratch']
  %s0 = inlined_call_operand.vmem [shape: f32[24,16], index: 0, kind: input, shape index: {}]
  %s1 = inlined_call_operand.vmem [shape: f32[24,24], index: 1, kind: input, shape index: {}]
  %s2 = inlined_call_operand.vmem [shape: f32[4,24], index: 2, kind: input, shape index: {}]
  %s3 = inlined_call_operand.vmem [shape: f32[3,32], index: 3, kind: input, shape index: {}]
  %s4 = inlined_call_operand.vmem [shape: f32[16,32], index: 4, kind: input, shape index: {}]
  %s5 = inlined_call_operand.vmem [shape: f32[1,32], index: 5, kind: input, shape index: {}]
  %s6 = inlined_call_operand.vmem [shape: f32[32,64], index: 6, kind: input, shape index: {}]
  %s7 = inlined_call_operand.vmem [shape: f32[1,64], index: 7, kind: input, shape index: {}]
  %s8 = inlined_call_operand.vmem [shape: f32[32,256], index: 8, kind: input, shape index: {}]
  %s9 = inlined_call_operand.vmem [shape: f32[1,256], index: 9, kind: input, shape index: {}]
  %s10 = inlined_call_operand.vmem [shape: f32[256,64], index: 10, kind: input, shape index: {}]
  %s11 = inlined_call_operand.vmem [shape: f32[1,64], index: 11, kind: input, shape index: {}]
  %s12 = inlined_call_operand.hbm [shape: f32[4,64], index: 12, kind: output, shape index: {0}]
  %s13 = inlined_call_operand.hbm [shape: f32[3,64], index: 13, kind: output, shape index: {1}]
  %14 = xla_tuple %s12, %s13
  %s15 = sld [smem:[#allocation0]]
  $region66: #{encoder_forward.1} parent=0
    _
  %s17 = ssub.s32 1, %s15
  %s18 = scalar_select 0, %s17, %s15
  $region1: #{encoder_forward.1} parent=0
    #allocation2 [shape = 'u8[2048]{0}', space=vmem, size = 0x800, scoped, tag = 'output window, operand 0, single buffered']
    #allocation3 [shape = 's32[1]{0}', space=sflag, size = 0x4, scoped, tag = 'scoped memory for encoder_forward.1']
    #allocation4 [shape = 'u8[2048]{0}', space=vmem, size = 0x800, scoped, tag = 'output window, operand 1, single buffered']
    #allocation5 [shape = 's32[1]{0}', space=sflag, size = 0x4, scoped, tag = 'scoped memory for encoder_forward.1']
    %19 = vsyncpa [#allocation3], 0
    %20 = vsyncpa [#allocation5], 0
    // Predicated region
    $region2: #{encoder_forward.1} parent=1 // pred_check
      _
    $region3: #{encoder_forward.1} parent=1 // pred_check_branch
      %22 = sbr.rel (0) target = $region5
    $region4: #{encoder_forward.1} parent=1 // pred_region
      _
    $region5: #{encoder_forward.1} parent=1 // pred_fallthru
      _
    // Predicated region
    $region6: #{encoder_forward.1} parent=1 // pred_check
      _
    $region7: #{encoder_forward.1} parent=1 // pred_check_branch
      %24 = sbr.rel (0) target = $region9
    $region8: #{encoder_forward.1} parent=1 // pred_region
      _
    $region9: #{encoder_forward.1} parent=1 // pred_fallthru
      _
    // Predicated region
    $region10: #{encoder_forward.1} parent=1 // pred_check
      _
    $region11: #{encoder_forward.1} parent=1 // pred_check_branch
      %26 = sbr.rel (0) target = $region13
    $region12: #{encoder_forward.1} parent=1 // pred_region
      _
    $region13: #{encoder_forward.1} parent=1 // pred_fallthru
      _
    // Predicated region
    $region14: #{encoder_forward.1} parent=1 // pred_check
      _
    $region15: #{encoder_forward.1} parent=1 // pred_check_branch
      %28 = sbr.rel (0) target = $region17
    $region16: #{encoder_forward.1} parent=1 // pred_region
      _
    $region17: #{encoder_forward.1} parent=1 // pred_fallthru
      _
    // Predicated region
    $region18: #{encoder_forward.1} parent=1 // pred_check
      _
    $region19: #{encoder_forward.1} parent=1 // pred_check_branch
      %30 = sbr.rel (0) target = $region21
    $region20: #{encoder_forward.1} parent=1 // pred_region
      _
    $region21: #{encoder_forward.1} parent=1 // pred_fallthru
      _
    // Predicated region
    $region22: #{encoder_forward.1} parent=1 // pred_check
      _
    $region23: #{encoder_forward.1} parent=1 // pred_check_branch
      %32 = sbr.rel (0) target = $region25
    $region24: #{encoder_forward.1} parent=1 // pred_region
      _
    $region25: #{encoder_forward.1} parent=1 // pred_fallthru
      _
    // Predicated region
    $region26: #{encoder_forward.1} parent=1 // pred_check
      _
    $region27: #{encoder_forward.1} parent=1 // pred_check_branch
      %34 = sbr.rel (0) target = $region29
    $region28: #{encoder_forward.1} parent=1 // pred_region
      _
    $region29: #{encoder_forward.1} parent=1 // pred_fallthru
      _
    // Predicated region
    $region30: #{encoder_forward.1} parent=1 // pred_check
      _
    $region31: #{encoder_forward.1} parent=1 // pred_check_branch
      %36 = sbr.rel (0) target = $region33
    $region32: #{encoder_forward.1} parent=1 // pred_region
      _
    $region33: #{encoder_forward.1} parent=1 // pred_fallthru
      _
    // Predicated region
    $region34: #{encoder_forward.1} parent=1 // pred_check
      _
    $region35: #{encoder_forward.1} parent=1 // pred_check_branch
      %38 = sbr.rel (0) target = $region37
    $region36: #{encoder_forward.1} parent=1 // pred_region
      _
    $region37: #{encoder_forward.1} parent=1 // pred_fallthru
      _
    // Predicated region
    $region38: #{encoder_forward.1} parent=1 // pred_check
      _
    $region39: #{encoder_forward.1} parent=1 // pred_check_branch
      %40 = sbr.rel (0) target = $region41
    $region40: #{encoder_forward.1} parent=1 // pred_region
      _
    $region41: #{encoder_forward.1} parent=1 // pred_fallthru
      _
    // Predicated region
    $region42: #{encoder_forward.1} parent=1 // pred_check
      _
    $region43: #{encoder_forward.1} parent=1 // pred_check_branch
      %42 = sbr.rel (0) target = $region45
    $region44: #{encoder_forward.1} parent=1 // pred_region
      _
    $region45: #{encoder_forward.1} parent=1 // pred_fallthru
      _
    // Predicated region
    $region46: #{encoder_forward.1} parent=1 // pred_check
      _
    $region47: #{encoder_forward.1} parent=1 // pred_check_branch
      %44 = sbr.rel (0) target = $region49
    $region48: #{encoder_forward.1} parent=1 // pred_region
      _
    $region49: #{encoder_forward.1} parent=1 // pred_fallthru
      _
    %v45 = vld [vmem:[%s1] sm:$0xff]
    %v46 = vld [vmem:[%s1 + $0x8] sm:$0xff]
    %v47 = vld [vmem:[%s1 + $0x10] sm:$0xff]
    %v48 = vld [vmem:[%s0] sm:$0xff]
    %v49 = vld [vmem:[%s0 + $0x8] sm:$0xff]
    %v50 = vld [vmem:[%s0 + $0x10] sm:$0xff]
    %v51 = vld [vmem:[%s4] sm:$0xff]
    %v52 = vld [vmem:[%s4 + $0x8] sm:$0xff]
    %vm53 = vcmask 130048
    %v55 = vsel %vm53, %v48, 0
    %v58 = vsel %vm53, %v49, 0
    %v61 = vsel %vm53, %v50, 0
    %63 = vmatprep.subr.mxu0 0.0
    %64 = vmatpush1.msra.mxu0 0.0
    %65 = vmatprep.subr.mxu0 0.0
    %66 = vmatpush1.msra.mxu0 0.0
    %67 = vmatprep.subr.mxu0 0.0
    %68 = vmatpush1.msra.mxu0 0.0
    %69 = vmatprep.subr.mxu0 0.0
    %70 = vmatpush1.msra.mxu0 0.0
    %71 = vmatprep.subr.mxu0 0.0
    %72 = vmatpush1.msra.mxu0 0.0
    %73 = vmatprep.subr.mxu0 0.0
    %74 = vmatpush1.msra.mxu0 0.0
    %75 = vmatprep.subr.mxu0 0.0
    %76 = vmatpush1.msra.mxu0 0.0
    %77 = vmatprep.subr.mxu0 0.0
    %78 = vmatpush1.msra.mxu0 0.0
    %79 = vmatprep.subr.mxu0 0.0
    %80 = vmatpush1.msra.mxu0 0.0
    %81 = vmatprep.subr.mxu0 0.0
    %82 = vmatpush1.msra.mxu0 0.0
    %83 = vmatprep.subr.mxu0 0.0
    %84 = vmatpush1.msra.mxu0 0.0
    %85 = vmatprep.subr.mxu0 0.0
    %86 = vmatpush1.msra.mxu0 0.0
    %87 = vmatprep.subr.mxu0 0.0
    %88 = vmatpush1.msra.mxu0 0.0
    %89 = vmatprep.subr.mxu0 0.0
    %90 = vmatpush1.msra.mxu0 0.0
    %91 = vmatprep.subr.mxu0 0.0
    %92 = vmatpush1.msra.mxu0 %v52
    %93 = vmatprep.subr.mxu0 0.0
    %94 = vmatpush1.msra.mxu0 %v51
    %95 = vmatprep.subr.mxu0 0.0
    %96 = vmatpush2.msra.mxu0 0.0
    %97 = vmatprep.subr.mxu0 0.0
    %98 = vmatpush2.msra.mxu0 0.0
    %99 = vmatprep.subr.mxu0 0.0
    %100 = vmatpush2.msra.mxu0 0.0
    %101 = vmatprep.subr.mxu0 0.0
    %102 = vmatpush2.msra.mxu0 0.0
    %103 = vmatprep.subr.mxu0 0.0
    %104 = vmatpush2.msra.mxu0 0.0
    %105 = vmatprep.subr.mxu0 0.0
    %106 = vmatpush2.msra.mxu0 0.0
    %107 = vmatprep.subr.mxu0 0.0
    %108 = vmatpush2.msra.mxu0 0.0
    %109 = vmatprep.subr.mxu0 0.0
    %110 = vmatpush2.msra.mxu0 0.0
    %111 = vmatprep.subr.mxu0 0.0
    %112 = vmatpush2.msra.mxu0 0.0
    %113 = vmatprep.subr.mxu0 0.0
    %114 = vmatpush2.msra.mxu0 0.0
    %115 = vmatprep.subr.mxu0 0.0
    %116 = vmatpush2.msra.mxu0 0.0
    %117 = vmatprep.subr.mxu0 0.0
    %118 = vmatpush2.msra.mxu0 0.0
    %119 = vmatprep.subr.mxu0 0.0
    %120 = vmatpush2.msra.mxu0 0.0
    %121 = vmatprep.subr.mxu0 0.0
    %122 = vmatpush2.msra.mxu0 0.0
    %123 = vmatprep.subr.mxu0 0.0
    %124 = vmatpush2.msra.mxu0 0.0
    %125 = vmatprep.subr.mxu0 0.0
    %126 = vmatpush2.msra.mxu0 0.0
    %127 = vmatprep.mubr.f32.mxu0 0.0
    %128 = vmatmul.mubr.f32.gmra.mxu0 %v55
    %v129 = vpop.f32.mrf.mxu0
    %v130 = vadd.f32 0.0, %v129
    %v131 = vpop.f32.mrf.mxu0
    %132 = vmatprep.mubr.f32.mxu0 0.0
    %133 = vmatmul.mubr.f32.gmra.mxu0 %v58
    %v134 = vpop.f32.mrf.mxu0
    %v135 = vadd.f32 0.0, %v134
    %v136 = vpop.f32.mrf.mxu0
    %137 = vmatprep.mubr.f32.mxu0 0.0
    %138 = vmatmul.mubr.f32.gmra.mxu0 %v61
    %v139 = vpop.f32.mrf.mxu0
    %v140 = vadd.f32 0.0, %v139
    %v141 = vpop.f32.mrf.mxu0
    %142 = vdwg.mxu0
    %v143 = vld [vmem:[%s5] sm:$0x1]
    %v145 = vlaneseq
    %v146 = vshrl.u32 %v145, 7
    %v147 = vsub.s32 0, %v146
    %v148 = vrot.slane %v143, %v147
    %vm150 = vcmask 195584
    %v152 = vsel %vm150, %v45, 0
    %v155 = vsel %vm150, %v46, 0
    %v158 = vsel %vm150, %v47, 0
    %160 = vmatprep.subr.mxu0 0.0
    %161 = vmatpush1.msra.mxu0 0.0
    %162 = vmatprep.subr.mxu0 0.0
    %163 = vmatpush1.msra.mxu0 0.0
    %164 = vmatprep.subr.mxu0 0.0
    %165 = vmatpush1.msra.mxu0 0.0
    %166 = vmatprep.subr.mxu0 0.0
    %167 = vmatpush1.msra.mxu0 0.0
    %168 = vmatprep.subr.mxu0 0.0
    %169 = vmatpush1.msra.mxu0 0.0
    %170 = vmatprep.subr.mxu0 0.0
    %171 = vmatpush1.msra.mxu0 0.0
    %172 = vmatprep.subr.mxu0 0.0
    %173 = vmatpush1.msra.mxu0 0.0
    %174 = vmatprep.subr.mxu0 0.0
    %175 = vmatpush1.msra.mxu0 0.0
    %176 = vmatprep.subr.mxu0 0.0
    %177 = vmatpush1.msra.mxu0 0.0
    %178 = vmatprep.subr.mxu0 0.0
    %179 = vmatpush1.msra.mxu0 0.0
    %180 = vmatprep.subr.mxu0 0.0
    %181 = vmatpush1.msra.mxu0 0.0
    %182 = vmatprep.subr.mxu0 0.0
    %183 = vmatpush1.msra.mxu0 0.0
    %184 = vmatprep.subr.mxu0 0.0
    %185 = vmatpush1.msra.mxu0 0.0
    %186 = vmatprep.subr.mxu0 0.0
    %187 = vmatpush1.msra.mxu0 %v140
    %188 = vmatprep.subr.mxu0 0.0
    %189 = vmatpush1.msra.mxu0 %v135
    %190 = vmatprep.subr.mxu0 0.0
    %191 = vmatpush1.msra.mxu0 %v130
    %192 = vmatprep.subr.mxu0 0.0
    %193 = vmatpush2.msra.mxu0 0.0
    %194 = vmatprep.subr.mxu0 0.0
    %195 = vmatpush2.msra.mxu0 0.0
    %196 = vmatprep.subr.mxu0 0.0
    %197 = vmatpush2.msra.mxu0 0.0
    %198 = vmatprep.subr.mxu0 0.0
    %199 = vmatpush2.msra.mxu0 0.0
    %200 = vmatprep.subr.mxu0 0.0
    %201 = vmatpush2.msra.mxu0 0.0
    %202 = vmatprep.subr.mxu0 0.0
    %203 = vmatpush2.msra.mxu0 0.0
    %204 = vmatprep.subr.mxu0 0.0
    %205 = vmatpush2.msra.mxu0 0.0
    %206 = vmatprep.subr.mxu0 0.0
    %207 = vmatpush2.msra.mxu0 0.0
    %208 = vmatprep.subr.mxu0 0.0
    %209 = vmatpush2.msra.mxu0 0.0
    %210 = vmatprep.subr.mxu0 0.0
    %211 = vmatpush2.msra.mxu0 0.0
    %212 = vmatprep.subr.mxu0 0.0
    %213 = vmatpush2.msra.mxu0 0.0
    %214 = vmatprep.subr.mxu0 0.0
    %215 = vmatpush2.msra.mxu0 0.0
    %216 = vmatprep.subr.mxu0 0.0
    %217 = vmatpush2.msra.mxu0 0.0
    %218 = vmatprep.subr.mxu0 0.0
    %219 = vmatpush2.msra.mxu0 0.0
    %220 = vmatprep.subr.mxu0 0.0
    %221 = vmatpush2.msra.mxu0 0.0
    %222 = vmatprep.subr.mxu0 0.0
    %223 = vmatpush2.msra.mxu0 0.0
    %224 = vmatprep.mubr.f32.mxu0 0.0
    %225 = vmatmul.mubr.f32.gmra.mxu0 %v152
    %v226 = vpop.f32.mrf.mxu0
    %v227 = vadd.f32 %v148, %v226
    %v228 = vpop.f32.mrf.mxu0
    %229 = vmatprep.mubr.f32.mxu0 0.0
    %230 = vmatmul.mubr.f32.gmra.mxu0 %v155
    %v231 = vpop.f32.mrf.mxu0
    %v232 = vadd.f32 %v148, %v231
    %v233 = vpop.f32.mrf.mxu0
    %234 = vmatprep.mubr.f32.mxu0 0.0
    %235 = vmatmul.mubr.f32.gmra.mxu0 %v158
    %v236 = vpop.f32.mrf.mxu0
    %v237 = vadd.f32 %v148, %v236
    %v238 = vpop.f32.mrf.mxu0
    %239 = vdwg.mxu0
    %v240 = vmax.f32 %v227, 0.0
    %v241 = vmax.f32 %v232, 0.0
    %v242 = vmax.f32 %v237, 0.0
    %v243 = vld [vmem:[%s6] sm:$0xff]
    %v244 = vld [vmem:[%s6 + $0x8] sm:$0xff]
    %v245 = vld [vmem:[%s6 + $0x10] sm:$0xff]
    %v246 = vld [vmem:[%s6 + $0x18] sm:$0xff]
    %vm247 = vcmask 261120
    %v249 = vsel %vm247, %v240, 0
    %v252 = vsel %vm247, %v241, 0
    %v255 = vsel %vm247, %v242, 0
    %257 = vmatprep.subr.mxu0 0.0
    %258 = vmatpush1.msra.mxu0 0.0
    %259 = vmatprep.subr.mxu0 0.0
    %260 = vmatpush1.msra.mxu0 0.0
    %261 = vmatprep.subr.mxu0 0.0
    %262 = vmatpush1.msra.mxu0 0.0
    %263 = vmatprep.subr.mxu0 0.0
    %264 = vmatpush1.msra.mxu0 0.0
    %265 = vmatprep.subr.mxu0 0.0
    %266 = vmatpush1.msra.mxu0 0.0
    %267 = vmatprep.subr.mxu0 0.0
    %268 = vmatpush1.msra.mxu0 0.0
    %269 = vmatprep.subr.mxu0 0.0
    %270 = vmatpush1.msra.mxu0 0.0
    %271 = vmatprep.subr.mxu0 0.0
    %272 = vmatpush1.msra.mxu0 0.0
    %273 = vmatprep.subr.mxu0 0.0
    %274 = vmatpush1.msra.mxu0 0.0
    %275 = vmatprep.subr.mxu0 0.0
    %276 = vmatpush1.msra.mxu0 0.0
    %277 = vmatprep.subr.mxu0 0.0
    %278 = vmatpush1.msra.mxu0 0.0
    %279 = vmatprep.subr.mxu0 0.0
    %280 = vmatpush1.msra.mxu0 0.0
    %281 = vmatprep.subr.mxu0 0.0
    %282 = vmatpush1.msra.mxu0 %v246
    %283 = vmatprep.subr.mxu0 0.0
    %284 = vmatpush1.msra.mxu0 %v245
    %285 = vmatprep.subr.mxu0 0.0
    %286 = vmatpush1.msra.mxu0 %v244
    %287 = vmatprep.subr.mxu0 0.0
    %288 = vmatpush1.msra.mxu0 %v243
    %289 = vmatprep.subr.mxu0 0.0
    %290 = vmatpush2.msra.mxu0 0.0
    %291 = vmatprep.subr.mxu0 0.0
    %292 = vmatpush2.msra.mxu0 0.0
    %293 = vmatprep.subr.mxu0 0.0
    %294 = vmatpush2.msra.mxu0 0.0
    %295 = vmatprep.subr.mxu0 0.0
    %296 = vmatpush2.msra.mxu0 0.0
    %297 = vmatprep.subr.mxu0 0.0
    %298 = vmatpush2.msra.mxu0 0.0
    %299 = vmatprep.subr.mxu0 0.0
    %300 = vmatpush2.msra.mxu0 0.0
    %301 = vmatprep.subr.mxu0 0.0
    %302 = vmatpush2.msra.mxu0 0.0
    %303 = vmatprep.subr.mxu0 0.0
    %304 = vmatpush2.msra.mxu0 0.0
    %305 = vmatprep.subr.mxu0 0.0
    %306 = vmatpush2.msra.mxu0 0.0
    %307 = vmatprep.subr.mxu0 0.0
    %308 = vmatpush2.msra.mxu0 0.0
    %309 = vmatprep.subr.mxu0 0.0
    %310 = vmatpush2.msra.mxu0 0.0
    %311 = vmatprep.subr.mxu0 0.0
    %312 = vmatpush2.msra.mxu0 0.0
    %313 = vmatprep.subr.mxu0 0.0
    %314 = vmatpush2.msra.mxu0 0.0
    %315 = vmatprep.subr.mxu0 0.0
    %316 = vmatpush2.msra.mxu0 0.0
    %317 = vmatprep.subr.mxu0 0.0
    %318 = vmatpush2.msra.mxu0 0.0
    %319 = vmatprep.subr.mxu0 0.0
    %320 = vmatpush2.msra.mxu0 0.0
    %321 = vmatprep.mubr.f32.mxu0 0.0
    %322 = vmatmul.mubr.f32.gmra.mxu0 %v249
    %v323 = vpop.f32.mrf.mxu0
    %v324 = vadd.f32 0.0, %v323
    %v325 = vpop.f32.mrf.mxu0
    %326 = vmatprep.mubr.f32.mxu0 0.0
    %327 = vmatmul.mubr.f32.gmra.mxu0 %v252
    %v328 = vpop.f32.mrf.mxu0
    %v329 = vadd.f32 0.0, %v328
    %v330 = vpop.f32.mrf.mxu0
    %331 = vmatprep.mubr.f32.mxu0 0.0
    %332 = vmatmul.mubr.f32.gmra.mxu0 %v255
    %v333 = vpop.f32.mrf.mxu0
    %v334 = vadd.f32 0.0, %v333
    %v335 = vpop.f32.mrf.mxu0
    %336 = vdwg.mxu0
    %v337 = vld [vmem:[%s7] sm:$0x1]
    %v339 = vlaneseq
    %v340 = vshrl.u32 %v339, 7
    %v341 = vsub.s32 0, %v340
    %v342 = vrot.slane %v337, %v341
    %344 = vmatprep.subr.mxu0 0.0
    %345 = vmatpush1.msra.mxu0 0.0
    %346 = vmatprep.subr.mxu0 0.0
    %347 = vmatpush1.msra.mxu0 0.0
    %348 = vmatprep.subr.mxu0 0.0
    %349 = vmatpush1.msra.mxu0 0.0
    %350 = vmatprep.subr.mxu0 0.0
    %351 = vmatpush1.msra.mxu0 0.0
    %352 = vmatprep.subr.mxu0 0.0
    %353 = vmatpush1.msra.mxu0 0.0
    %354 = vmatprep.subr.mxu0 0.0
    %355 = vmatpush1.msra.mxu0 0.0
    %356 = vmatprep.subr.mxu0 0.0
    %357 = vmatpush1.msra.mxu0 0.0
    %358 = vmatprep.subr.mxu0 0.0
    %359 = vmatpush1.msra.mxu0 0.0
    %360 = vmatprep.subr.mxu0 0.0
    %361 = vmatpush1.msra.mxu0 0.0
    %362 = vmatprep.subr.mxu0 0.0
    %363 = vmatpush1.msra.mxu0 0.0
    %364 = vmatprep.subr.mxu0 0.0
    %365 = vmatpush1.msra.mxu0 0.0
    %366 = vmatprep.subr.mxu0 0.0
    %367 = vmatpush1.msra.mxu0 0.0
    %368 = vmatprep.subr.mxu0 0.0
    %369 = vmatpush1.msra.mxu0 0.0
    %370 = vmatprep.subr.mxu0 0.0
    %371 = vmatpush1.msra.mxu0 %v334
    %372 = vmatprep.subr.mxu0 0.0
    %373 = vmatpush1.msra.mxu0 %v329
    %374 = vmatprep.subr.mxu0 0.0
    %375 = vmatpush1.msra.mxu0 %v324
    %376 = vmatprep.subr.mxu0 0.0
    %377 = vmatpush2.msra.mxu0 0.0
    %378 = vmatprep.subr.mxu0 0.0
    %379 = vmatpush2.msra.mxu0 0.0
    %380 = vmatprep.subr.mxu0 0.0
    %381 = vmatpush2.msra.mxu0 0.0
    %382 = vmatprep.subr.mxu0 0.0
    %383 = vmatpush2.msra.mxu0 0.0
    %384 = vmatprep.subr.mxu0 0.0
    %385 = vmatpush2.msra.mxu0 0.0
    %386 = vmatprep.subr.mxu0 0.0
    %387 = vmatpush2.msra.mxu0 0.0
    %388 = vmatprep.subr.mxu0 0.0
    %389 = vmatpush2.msra.mxu0 0.0
    %390 = vmatprep.subr.mxu0 0.0
    %391 = vmatpush2.msra.mxu0 0.0
    %392 = vmatprep.subr.mxu0 0.0
    %393 = vmatpush2.msra.mxu0 0.0
    %394 = vmatprep.subr.mxu0 0.0
    %395 = vmatpush2.msra.mxu0 0.0
    %396 = vmatprep.subr.mxu0 0.0
    %397 = vmatpush2.msra.mxu0 0.0
    %398 = vmatprep.subr.mxu0 0.0
    %399 = vmatpush2.msra.mxu0 0.0
    %400 = vmatprep.subr.mxu0 0.0
    %401 = vmatpush2.msra.mxu0 0.0
    %402 = vmatprep.subr.mxu0 0.0
    %403 = vmatpush2.msra.mxu0 0.0
    %404 = vmatprep.subr.mxu0 0.0
    %405 = vmatpush2.msra.mxu0 0.0
    %406 = vmatprep.subr.mxu0 0.0
    %407 = vmatpush2.msra.mxu0 0.0
    %408 = vmatprep.mubr.f32.mxu0 0.0
    %409 = vmatmul.mubr.f32.gmra.mxu0 %v152
    %v410 = vpop.f32.mrf.mxu0
    %v411 = vadd.f32 %v342, %v410
    %v412 = vpop.f32.mrf.mxu0
    %413 = vmatprep.mubr.f32.mxu0 0.0
    %414 = vmatmul.mubr.f32.gmra.mxu0 %v155
    %v415 = vpop.f32.mrf.mxu0
    %v416 = vadd.f32 %v342, %v415
    %v417 = vpop.f32.mrf.mxu0
    %418 = vmatprep.mubr.f32.mxu0 0.0
    %419 = vmatmul.mubr.f32.gmra.mxu0 %v158
    %v420 = vpop.f32.mrf.mxu0
    %v421 = vadd.f32 %v342, %v420
    %v422 = vpop.f32.mrf.mxu0
    %423 = vdwg.mxu0
    %v424 = vmax.f32 %v411, 0.0
    %v425 = vmax.f32 %v416, 0.0
    %v426 = vmax.f32 %v421, 0.0
    %v427 = vld [vmem:[%s2] sm:$0xf]
    %v428 = vlaneseq
    %v429 = vshrl.u32 %v428, 7
    %v430 = vsub.s32 0, %v429
    %v431 = vrot.slane %v427, %v430
    %433 = vbcast.lane.b32.xlu0 %v431, 256
    %v434 = vpop.permute.xlu0 %433
    %s436 = sor.u32 256, 8
    %437 = vbcast.lane.b32.xlu0 %v431, %s436
    %v438 = vpop.permute.xlu0 %437
    %s440 = sor.u32 256, 16
    %441 = vbcast.lane.b32.xlu0 %v431, %s440
    %v442 = vpop.permute.xlu0 %441
    %v443 = vlaneseq
    %v444 = vshrl.u32 %v443, 7
    %v445 = vsub.s32 1, %v444
    %v446 = vrot.slane %v427, %v445
    %448 = vbcast.lane.b32.xlu0 %v446, 256
    %v449 = vpop.permute.xlu0 %448
    %s451 = sor.u32 256, 8
    %452 = vbcast.lane.b32.xlu0 %v446, %s451
    %v453 = vpop.permute.xlu0 %452
    %s455 = sor.u32 256, 16
    %456 = vbcast.lane.b32.xlu0 %v446, %s455
    %v457 = vpop.permute.xlu0 %456
    %v458 = vlaneseq
    %v459 = vshrl.u32 %v458, 7
    %v460 = vsub.s32 2, %v459
    %v461 = vrot.slane %v427, %v460
    %463 = vbcast.lane.b32.xlu0 %v461, 256
    %v464 = vpop.permute.xlu0 %463
    %s466 = sor.u32 256, 8
    %467 = vbcast.lane.b32.xlu0 %v461, %s466
    %v468 = vpop.permute.xlu0 %467
    %s470 = sor.u32 256, 16
    %471 = vbcast.lane.b32.xlu0 %v461, %s470
    %v472 = vpop.permute.xlu0 %471
    %v473 = vlaneseq
    %v474 = vshrl.u32 %v473, 7
    %v475 = vsub.s32 3, %v474
    %v476 = vrot.slane %v427, %v475
    %478 = vbcast.lane.b32.xlu0 %v476, 256
    %v479 = vpop.permute.xlu0 %478
    %s481 = sor.u32 256, 8
    %482 = vbcast.lane.b32.xlu0 %v476, %s481
    %v483 = vpop.permute.xlu0 %482
    %s485 = sor.u32 256, 16
    %486 = vbcast.lane.b32.xlu0 %v476, %s485
    %v487 = vpop.permute.xlu0 %486
    %vm488 = vcmp.gt.f32.partialorder %v434, 0.5
    %vm489 = vcmp.gt.f32.partialorder %v438, 0.5
    %vm490 = vcmp.gt.f32.partialorder %v442, 0.5
    %vm491 = vcmp.gt.f32.partialorder %v449, 0.5
    %vm492 = vcmp.gt.f32.partialorder %v453, 0.5
    %vm493 = vcmp.gt.f32.partialorder %v457, 0.5
    %vm494 = vcmp.gt.f32.partialorder %v464, 0.5
    %vm495 = vcmp.gt.f32.partialorder %v468, 0.5
    %vm496 = vcmp.gt.f32.partialorder %v472, 0.5
    %vm497 = vcmp.gt.f32.partialorder %v479, 0.5
    %vm498 = vcmp.gt.f32.partialorder %v483, 0.5
    %vm499 = vcmp.gt.f32.partialorder %v487, 0.5
    %v500 = vsel %vm488, 1, 0
    %v501 = vsel %vm489, 1, 0
    %v502 = vsel %vm490, 1, 0
    %v503 = vsel %vm491, 1, 0
    %v504 = vsel %vm492, 1, 0
    %v505 = vsel %vm493, 1, 0
    %v506 = vsel %vm494, 1, 0
    %v507 = vsel %vm495, 1, 0
    %v508 = vsel %vm496, 1, 0
    %v509 = vsel %vm497, 1, 0
    %v510 = vsel %vm498, 1, 0
    %v511 = vsel %vm499, 1, 0
    %vm512 = vcmp.eq.s32.totalorder %v500, 1
    %vm513 = vcmp.eq.s32.totalorder %v501, 1
    %vm514 = vcmp.eq.s32.totalorder %v502, 1
    %vm515 = vcmp.eq.s32.totalorder %v503, 1
    %vm516 = vcmp.eq.s32.totalorder %v504, 1
    %vm517 = vcmp.eq.s32.totalorder %v505, 1
    %vm518 = vcmp.eq.s32.totalorder %v506, 1
    %vm519 = vcmp.eq.s32.totalorder %v507, 1
    %vm520 = vcmp.eq.s32.totalorder %v508, 1
    %vm521 = vcmp.eq.s32.totalorder %v509, 1
    %vm522 = vcmp.eq.s32.totalorder %v510, 1
    %vm523 = vcmp.eq.s32.totalorder %v511, 1
    %v524 = vsel %vm512, %v424, -1e+30
    %v525 = vsel %vm513, %v425, -1e+30
    %v526 = vsel %vm514, %v426, -1e+30
    %v527 = vsel %vm515, %v424, -1e+30
    %v528 = vsel %vm516, %v425, -1e+30
    %v529 = vsel %vm517, %v426, -1e+30
    %v530 = vsel %vm518, %v424, -1e+30
    %v531 = vsel %vm519, %v425, -1e+30
    %v532 = vsel %vm520, %v426, -1e+30
    %v533 = vsel %vm521, %v424, -1e+30
    %v534 = vsel %vm522, %v425, -1e+30
    %v535 = vsel %vm523, %v426, -1e+30
    %vm536 = vcmask 523264
    %v537 = vsel %vm536, %v524, -inf
    %v538 = vsel %vm536, %v525, -inf
    %v539 = vmax.f32 %v537, %v538
    %v540 = vsel %vm536, %v526, -inf
    %v541 = vmax.f32 %v539, %v540
    %v542 = vrot.slane %v541, 4
    %v543 = vmax.f32 %v541, %v542
    %v544 = vrot.slane %v543, 2
    %v545 = vmax.f32 %v543, %v544
    %v546 = vrot.slane %v545, 1
    %v547 = vmax.f32 %v545, %v546
    %v548 = vsel %vm536, %v527, -inf
    %v549 = vsel %vm536, %v528, -inf
    %v550 = vmax.f32 %v548, %v549
    %v551 = vsel %vm536, %v529, -inf
    %v552 = vmax.f32 %v550, %v551
    %v553 = vrot.slane %v552, 4
    %v554 = vmax.f32 %v552, %v553
    %v555 = vrot.slane %v554, 2
    %v556 = vmax.f32 %v554, %v555
    %v557 = vrot.slane %v556, 1
    %v558 = vmax.f32 %v556, %v557
    %v559 = vsel %vm536, %v530, -inf
    %v560 = vsel %vm536, %v531, -inf
    %v561 = vmax.f32 %v559, %v560
    %v562 = vsel %vm536, %v532, -inf
    %v563 = vmax.f32 %v561, %v562
    %v564 = vrot.slane %v563, 4
    %v565 = vmax.f32 %v563, %v564
    %v566 = vrot.slane %v565, 2
    %v567 = vmax.f32 %v565, %v566
    %v568 = vrot.slane %v567, 1
    %v569 = vmax.f32 %v567, %v568
    %v570 = vsel %vm536, %v533, -inf
    %v571 = vsel %vm536, %v534, -inf
    %v572 = vmax.f32 %v570, %v571
    %v573 = vsel %vm536, %v535, -inf
    %v574 = vmax.f32 %v572, %v573
    %v575 = vrot.slane %v574, 4
    %v576 = vmax.f32 %v574, %v575
    %v577 = vrot.slane %v576, 2
    %v578 = vmax.f32 %v576, %v577
    %v579 = vrot.slane %v578, 1
    %v580 = vmax.f32 %v578, %v579
    %vm585 = vcmask 1041409
    %v586 = vsel %vm585, %v558, %v547
    %vm587 = vcmask 1042434
    %v588 = vsel %vm587, %v569, %v586
    %vm589 = vcmask 1043459
    %v590 = vsel %vm589, %v580, %v588
    %vm592 = vcmask 519168
    %593 = vst.msk [vmem:[#allocation2] sm:$0xf] %vm592, %v590
    %v594 = vld [vmem:[%s3] sm:$0x7]
    %v595 = vld [vmem:[%s8] sm:$0xff]
    %v596 = vld [vmem:[%s8 + $0x8] sm:$0xff]
    %v597 = vld [vmem:[%s8 + $0x10] sm:$0xff]
    %v598 = vld [vmem:[%s8 + $0x18] sm:$0xff]
    %v599 = vld [vmem:[%s8 + $0x20] sm:$0xff]
    %v600 = vld [vmem:[%s8 + $0x28] sm:$0xff]
    %v601 = vld [vmem:[%s8 + $0x30] sm:$0xff]
    %v602 = vld [vmem:[%s8 + $0x38] sm:$0xff]
    %v603 = vld [vmem:[%s9] sm:$0x3]
    %v605 = vlaneseq
    %v606 = vshrl.u32 %v605, 7
    %v607 = vsub.s32 0, %v606
    %v608 = vrot.slane %v603, %v607
    %v609 = vlaneseq
    %v610 = vshrl.u32 %v609, 7
    %v611 = vsub.s32 1, %v610
    %v612 = vrot.slane %v603, %v611
    %v616 = vsel %vm247, %v594, 0
    %618 = vmatprep.subr.mxu0 0.0
    %619 = vmatpush1.msra.mxu0 0.0
    %620 = vmatprep.subr.mxu0 0.0
    %621 = vmatpush1.msra.mxu0 0.0
    %622 = vmatprep.subr.mxu0 0.0
    %623 = vmatpush1.msra.mxu0 0.0
    %624 = vmatprep.subr.mxu0 0.0
    %625 = vmatpush1.msra.mxu0 0.0
    %626 = vmatprep.subr.mxu0 0.0
    %627 = vmatpush1.msra.mxu0 0.0
    %628 = vmatprep.subr.mxu0 0.0
    %629 = vmatpush1.msra.mxu0 0.0
    %630 = vmatprep.subr.mxu0 0.0
    %631 = vmatpush1.msra.mxu0 0.0
    %632 = vmatprep.subr.mxu0 0.0
    %633 = vmatpush1.msra.mxu0 0.0
    %634 = vmatprep.subr.mxu0 0.0
    %635 = vmatpush1.msra.mxu0 0.0
    %636 = vmatprep.subr.mxu0 0.0
    %637 = vmatpush1.msra.mxu0 0.0
    %638 = vmatprep.subr.mxu0 0.0
    %639 = vmatpush1.msra.mxu0 0.0
    %640 = vmatprep.subr.mxu0 0.0
    %641 = vmatpush1.msra.mxu0 0.0
    %642 = vmatprep.subr.mxu0 %v602
    %643 = vmatpush1.msra.mxu0 %v601
    %644 = vmatprep.subr.mxu0 %v600
    %645 = vmatpush1.msra.mxu0 %v599
    %646 = vmatprep.subr.mxu0 %v598
    %647 = vmatpush1.msra.mxu0 %v597
    %648 = vmatprep.subr.mxu0 %v596
    %649 = vmatpush1.msra.mxu0 %v595
    %650 = vmatprep.subr.mxu0 0.0
    %651 = vmatpush2.msra.mxu0 0.0
    %652 = vmatprep.subr.mxu0 0.0
    %653 = vmatpush2.msra.mxu0 0.0
    %654 = vmatprep.subr.mxu0 0.0
    %655 = vmatpush2.msra.mxu0 0.0
    %656 = vmatprep.subr.mxu0 0.0
    %657 = vmatpush2.msra.mxu0 0.0
    %658 = vmatprep.subr.mxu0 0.0
    %659 = vmatpush2.msra.mxu0 0.0
    %660 = vmatprep.subr.mxu0 0.0
    %661 = vmatpush2.msra.mxu0 0.0
    %662 = vmatprep.subr.mxu0 0.0
    %663 = vmatpush2.msra.mxu0 0.0
    %664 = vmatprep.subr.mxu0 0.0
    %665 = vmatpush2.msra.mxu0 0.0
    %666 = vmatprep.subr.mxu0 0.0
    %667 = vmatpush2.msra.mxu0 0.0
    %668 = vmatprep.subr.mxu0 0.0
    %669 = vmatpush2.msra.mxu0 0.0
    %670 = vmatprep.subr.mxu0 0.0
    %671 = vmatpush2.msra.mxu0 0.0
    %672 = vmatprep.subr.mxu0 0.0
    %673 = vmatpush2.msra.mxu0 0.0
    %674 = vmatprep.subr.mxu0 0.0
    %675 = vmatpush2.msra.mxu0 0.0
    %676 = vmatprep.subr.mxu0 0.0
    %677 = vmatpush2.msra.mxu0 0.0
    %678 = vmatprep.subr.mxu0 0.0
    %679 = vmatpush2.msra.mxu0 0.0
    %680 = vmatprep.subr.mxu0 0.0
    %681 = vmatpush2.msra.mxu0 0.0
    %682 = vmatprep.mubr.f32.mxu0 0.0
    %683 = vmatmul.mubr.f32.gmra.mxu0 %v616
    %v684 = vpop.f32.mrf.mxu0
    %v685 = vadd.f32 %v608, %v684
    %v686 = vpop.f32.mrf.mxu0
    %v687 = vadd.f32 %v612, %v686
    %688 = vdwg.mxu0
    %v689 = vmax.f32 %v685, 0.0
    %v690 = vmax.f32 %v687, 0.0
    %v691 = vld [vmem:[%s10] sm:$0xff]
    %v692 = vld [vmem:[%s10 + $0x8] sm:$0xff]
    %v693 = vld [vmem:[%s10 + $0x10] sm:$0xff]
    %v694 = vld [vmem:[%s10 + $0x18] sm:$0xff]
    %v695 = vld [vmem:[%s10 + $0x20] sm:$0xff]
    %v696 = vld [vmem:[%s10 + $0x28] sm:$0xff]
    %v697 = vld [vmem:[%s10 + $0x30] sm:$0xff]
    %v698 = vld [vmem:[%s10 + $0x38] sm:$0xff]
    %v699 = vld [vmem:[%s10 + $0x40] sm:$0xff]
    %v700 = vld [vmem:[%s10 + $0x48] sm:$0xff]
    %v701 = vld [vmem:[%s10 + $0x50] sm:$0xff]
    %v702 = vld [vmem:[%s10 + $0x58] sm:$0xff]
    %v703 = vld [vmem:[%s10 + $0x60] sm:$0xff]
    %v704 = vld [vmem:[%s10 + $0x68] sm:$0xff]
    %v705 = vld [vmem:[%s10 + $0x70] sm:$0xff]
    %v706 = vld [vmem:[%s10 + $0x78] sm:$0xff]
    %v707 = vld [vmem:[%s10 + $0x80] sm:$0xff]
    %v708 = vld [vmem:[%s10 + $0x88] sm:$0xff]
    %v709 = vld [vmem:[%s10 + $0x90] sm:$0xff]
    %v710 = vld [vmem:[%s10 + $0x98] sm:$0xff]
    %v711 = vld [vmem:[%s10 + $0xa0] sm:$0xff]
    %v712 = vld [vmem:[%s10 + $0xa8] sm:$0xff]
    %v713 = vld [vmem:[%s10 + $0xb0] sm:$0xff]
    %v714 = vld [vmem:[%s10 + $0xb8] sm:$0xff]
    %v715 = vld [vmem:[%s10 + $0xc0] sm:$0xff]
    %v716 = vld [vmem:[%s10 + $0xc8] sm:$0xff]
    %v717 = vld [vmem:[%s10 + $0xd0] sm:$0xff]
    %v718 = vld [vmem:[%s10 + $0xd8] sm:$0xff]
    %v719 = vld [vmem:[%s10 + $0xe0] sm:$0xff]
    %v720 = vld [vmem:[%s10 + $0xe8] sm:$0xff]
    %v721 = vld [vmem:[%s10 + $0xf0] sm:$0xff]
    %v722 = vld [vmem:[%s10 + $0xf8] sm:$0xff]
    %v723 = vld [vmem:[%s11] sm:$0x1]
    %v725 = vlaneseq
    %v726 = vshrl.u32 %v725, 7
    %v727 = vsub.s32 0, %v726
    %v728 = vrot.slane %v723, %v727
    %730 = vmatprep.subr.mxu0 0.0
    %731 = vmatpush1.msra.mxu0 %v706
    %732 = vmatprep.subr.mxu0 0.0
    %733 = vmatpush1.msra.mxu0 %v705
    %734 = vmatprep.subr.mxu0 0.0
    %735 = vmatpush1.msra.mxu0 %v704
    %736 = vmatprep.subr.mxu0 0.0
    %737 = vmatpush1.msra.mxu0 %v703
    %738 = vmatprep.subr.mxu0 0.0
    %739 = vmatpush1.msra.mxu0 %v702
    %740 = vmatprep.subr.mxu0 0.0
    %741 = vmatpush1.msra.mxu0 %v701
    %742 = vmatprep.subr.mxu0 0.0
    %743 = vmatpush1.msra.mxu0 %v700
    %744 = vmatprep.subr.mxu0 0.0
    %745 = vmatpush1.msra.mxu0 %v699
    %746 = vmatprep.subr.mxu0 0.0
    %747 = vmatpush1.msra.mxu0 %v698
    %748 = vmatprep.subr.mxu0 0.0
    %749 = vmatpush1.msra.mxu0 %v697
    %750 = vmatprep.subr.mxu0 0.0
    %751 = vmatpush1.msra.mxu0 %v696
    %752 = vmatprep.subr.mxu0 0.0
    %753 = vmatpush1.msra.mxu0 %v695
    %754 = vmatprep.subr.mxu0 0.0
    %755 = vmatpush1.msra.mxu0 %v694
    %756 = vmatprep.subr.mxu0 0.0
    %757 = vmatpush1.msra.mxu0 %v693
    %758 = vmatprep.subr.mxu0 0.0
    %759 = vmatpush1.msra.mxu0 %v692
    %760 = vmatprep.subr.mxu0 0.0
    %761 = vmatpush1.msra.mxu0 %v691
    %762 = vmatprep.subr.mxu0 0.0
    %763 = vmatpush2.msra.mxu0 %v722
    %764 = vmatprep.subr.mxu0 0.0
    %765 = vmatpush2.msra.mxu0 %v721
    %766 = vmatprep.subr.mxu0 0.0
    %767 = vmatpush2.msra.mxu0 %v720
    %768 = vmatprep.subr.mxu0 0.0
    %769 = vmatpush2.msra.mxu0 %v719
    %770 = vmatprep.subr.mxu0 0.0
    %771 = vmatpush2.msra.mxu0 %v718
    %772 = vmatprep.subr.mxu0 0.0
    %773 = vmatpush2.msra.mxu0 %v717
    %774 = vmatprep.subr.mxu0 0.0
    %775 = vmatpush2.msra.mxu0 %v716
    %776 = vmatprep.subr.mxu0 0.0
    %777 = vmatpush2.msra.mxu0 %v715
    %778 = vmatprep.subr.mxu0 0.0
    %779 = vmatpush2.msra.mxu0 %v714
    %780 = vmatprep.subr.mxu0 0.0
    %781 = vmatpush2.msra.mxu0 %v713
    %782 = vmatprep.subr.mxu0 0.0
    %783 = vmatpush2.msra.mxu0 %v712
    %784 = vmatprep.subr.mxu0 0.0
    %785 = vmatpush2.msra.mxu0 %v711
    %786 = vmatprep.subr.mxu0 0.0
    %787 = vmatpush2.msra.mxu0 %v710
    %788 = vmatprep.subr.mxu0 0.0
    %789 = vmatpush2.msra.mxu0 %v709
    %790 = vmatprep.subr.mxu0 0.0
    %791 = vmatpush2.msra.mxu0 %v708
    %792 = vmatprep.subr.mxu0 0.0
    %793 = vmatpush2.msra.mxu0 %v707
    %794 = vmatprep.mubr.f32.mxu0 %v690
    %795 = vmatmul.mubr.f32.gmra.mxu0 %v689
    %v796 = vpop.f32.mrf.mxu0
    %v797 = vadd.f32 %v728, %v796
    %v798 = vpop.f32.mrf.mxu0
    %799 = vdwg.mxu0
    %v800 = vmax.f32 %v797, 0.0
    %vm801 = vcmask 518144
    %802 = vst.msk [vmem:[#allocation4] sm:$0x7] %vm801, %v800
    // Predicated region
    $region50: #{encoder_forward.1} parent=1 // pred_check
      _
    $region51: #{encoder_forward.1} parent=1 // pred_check_branch
      %804 = sbr.rel (0) target = $region53
    $region52: #{encoder_forward.1} parent=1 // pred_region
      %s806 = ssub.s32 64, 64
      %807 = vsyncadd [#allocation3], %s806
      %s809 = sshll.u32 [#allocation2], 4
      %s810 = int_to_ptr.vmem [resolvable:$true] %s809
      %812 = dma.vmem_to_hbm [thread:$0]  %s810, 64, %s12, [#allocation3]
    $region53: #{encoder_forward.1} parent=1 // pred_fallthru
      _
    // Predicated region
    $region54: #{encoder_forward.1} parent=1 // pred_check
      _
    $region55: #{encoder_forward.1} parent=1 // pred_check_branch
      %814 = sbr.rel (0) target = $region57
    $region56: #{encoder_forward.1} parent=1 // pred_region
      %s816 = ssub.s32 64, 64
      %817 = vsyncadd [#allocation5], %s816
      %s819 = sshll.u32 [#allocation4], 4
      %s820 = int_to_ptr.vmem [resolvable:$true] %s819
      %822 = dma.vmem_to_hbm [thread:$0]  %s820, 64, %s13, [#allocation5]
    $region57: #{encoder_forward.1} parent=1 // pred_fallthru
      _
    // Predicated region
    $region58: #{encoder_forward.1} parent=1 // pred_check
      _
    $region59: #{encoder_forward.1} parent=1 // pred_check_branch
      %824 = sbr.rel (0) target = $region61
    $region60: #{encoder_forward.1} parent=1 // pred_region
      %825 = dma.done [#allocation3], 64
    $region61: #{encoder_forward.1} parent=1 // pred_fallthru
      _
    // Predicated region
    $region62: #{encoder_forward.1} parent=1 // pred_check
      _
    $region63: #{encoder_forward.1} parent=1 // pred_check_branch
      %827 = sbr.rel (0) target = $region65
    $region64: #{encoder_forward.1} parent=1 // pred_region
      %828 = dma.done [#allocation5], 64
    $region65: #{encoder_forward.1} parent=1 // pred_fallthru
      _
    %829 = vsyncpa [#allocation3], 1
    %830 = vsyncpa [#allocation5], 1

</llo_original>
